<compile_context>
chip_gen: v5e
topology: v5e:2x2
jax: 0.10.0
libtpu: 0.0.40
codegen_flags: <defaults>
</compile_context>

<pallas_src>
import numpy as np
import jax
import jax.numpy as jnp
from jax import lax
from jax.experimental import pallas as pl
from jax.experimental.pallas import tpu as pltpu


# ---------------------------------------------------------------------------
# Parameters (mirror the nn.Parameter disk kernels in __init__)
# ---------------------------------------------------------------------------
DILATE_EXPLORED_RADIUS = 10
SELECT_BORDER_RADIUS = 1


def skimage_disk(radius):
    """skimage.morphology.disk(radius): 1 where dx^2 + dy^2 <= r^2."""
    yy, xx = np.mgrid[-radius:radius + 1, -radius:radius + 1]
    return (xx * xx + yy * yy <= radius * radius).astype(np.float32)


DILATE_EXPLORED_KERNEL = skimage_disk(DILATE_EXPLORED_RADIUS)[None, None]  # (1,1,21,21)
SELECT_BORDER_KERNEL = skimage_disk(SELECT_BORDER_RADIUS)[None, None]      # (1,1,3,3)


def _disk_row_groups(radius):
    """Per-row half-widths of the disk and contiguous |di| ranges per width.

    Returns (center_half_width, {half_width: (lo_di, hi_di)}).
    """
    widths = [int(np.floor(np.sqrt(radius * radius - di * di)))
              for di in range(radius + 1)]
    groups = {}
    for di in range(1, radius + 1):
        lo, hi = groups.get(widths[di], (di, di))
        groups[widths[di]] = (min(lo, di), max(hi, di))
    return widths[0], groups


# ---------------------------------------------------------------------------
# MXU banded-matmul binary dilation
# ---------------------------------------------------------------------------
def _dilate_disk_mxu(x_f32, radius, dist, band_cache):
    """Binary dilation of a {0,1} f32 plane with skimage disk(radius),
    zero-padded borders, as banded matmuls on the MXU.

    conv2d(x, disk, pad=r) = sum_w  S_w @ (x @ B_w)   (runs of the disk)
      B_w[i,j] = 1{|i-j| <= w}           (horizontal run of half-width w)
      S_w[i,j] = 1{lo <= |i-j| <= hi}    (vertical offsets with that width)
    All partial sums are small integer counts (exact in f32/bf16-accumulated
    MXU math); the final clamp to [0, 1] reproduces
    torch.clamp(conv2d(...), 0, 1) exactly for binary inputs.
    """
    def band(w):  # f32 0/1 band matrix, memoised at trace time
        if w not in band_cache:
            band_cache[w] = jnp.where(dist <= w, 1.0, 0.0)
        return band_cache[w]

    center_w, groups = _disk_row_groups(radius)

    xb = x_f32.astype(jnp.bfloat16)
    # Centre row (di = 0): the vertical-offset matrix is the identity.
    acc = jnp.dot(xb, band(center_w).astype(jnp.bfloat16),
                  preferred_element_type=jnp.float32)
    for w, (lo, hi) in sorted(groups.items()):
        s_w = (band(hi) - band(lo - 1)).astype(jnp.bfloat16)
        if w == 0:
            y = xb
        else:
            y = jnp.dot(xb, band(w).astype(jnp.bfloat16),
                        preferred_element_type=jnp.float32).astype(jnp.bfloat16)
        acc = acc + jnp.dot(s_w, y, preferred_element_type=jnp.float32)
    return jnp.clip(acc, 0.0, 1.0)


# ---------------------------------------------------------------------------
# Kernel body: one grid step per batch element
# ---------------------------------------------------------------------------
def _policy_kernel(found_ref, cat_ref, explored_ref, goal_ref):
    b = pl.program_id(0)
    found = found_ref[b] != 0          # SMEM scalar, computed in XLA

    @pl.when(found)
    def _():
        # reach_goal_if_in_map: goal is the exact-1 cells of the goal channel.
        goal_ref[0] = jnp.where(cat_ref[0] == 1.0, 1.0, 0.0)

    @pl.when(jnp.logical_not(found))
    def _():
        # explore_otherwise: frontier = border of the dilated explored region.
        M = explored_ref.shape[-1]
        explored_bin = jnp.where(explored_ref[0] != 0.0, 1.0, 0.0)  # 1 - (ch1 == 0)

        # Hoisted iota / |i-j| plane shared by both dilations.
        row = lax.broadcasted_iota(jnp.int32, (M, M), 0)
        col = lax.broadcasted_iota(jnp.int32, (M, M), 1)
        dist = jnp.abs(row - col)
        band_cache = {}

        dil = _dilate_disk_mxu(explored_bin, DILATE_EXPLORED_RADIUS, dist,
                               band_cache)
        inner = 1.0 - dil                                   # frontier_map
        border = _dilate_disk_mxu(inner, SELECT_BORDER_RADIUS, dist,
                                  band_cache)
        goal_ref[0] = border - inner


# ---------------------------------------------------------------------------
# Forward pass wrapper
# ---------------------------------------------------------------------------
def objectnav_frontier_forward(map_features, goal_category):
    map_features = map_features.astype(jnp.float32)
    B, C, M, _ = map_features.shape

    # Goal-channel gather + `found` reduction done in plain XLA (review item):
    # clamp the (category + 8) index so an out-of-range category cannot drive
    # an out-of-bounds DMA, and use jnp.any (exact for any M) for `found`.
    idx = jnp.clip(goal_category.astype(jnp.int32) + 8, 0, C - 1)
    cat_maps = jnp.take_along_axis(
        map_features, idx[:, None, None, None], axis=1)[:, 0]      # (B, M, M)
    explored = map_features[:, 1]                                  # (B, M, M)
    found = jnp.any(cat_maps == 1.0, axis=(-2, -1))                # (B,) bool
    found_i32 = found.astype(jnp.int32)

    grid_spec = pltpu.PrefetchScalarGridSpec(
        num_scalar_prefetch=1,          # found flags -> SMEM
        grid=(B,),
        in_specs=[
            pl.BlockSpec((1, M, M), lambda b, found_s: (b, 0, 0)),  # goal channel
            pl.BlockSpec((1, M, M), lambda b, found_s: (b, 0, 0)),  # explored ch.
        ],
        out_specs=pl.BlockSpec((1, M, M), lambda b, found_s: (b, 0, 0)),
    )

    # Scoped-VMEM headroom for large maps (v5e default is 16 MiB); capped well
    # under v7x's 64 MiB physical VMEM.
    plane_bytes = M * M * 4
    vmem_limit = int(min(max(28 * plane_bytes, 32 * 1024 * 1024),
                         56 * 1024 * 1024))

    goal_map = pl.pallas_call(
        _policy_kernel,
        grid_spec=grid_spec,
        out_shape=jax.ShapeDtypeStruct((B, M, M), jnp.float32),
        compiler_params=pltpu.CompilerParams(
            dimension_semantics=("parallel",),   # batch steps are independent
            vmem_limit_bytes=vmem_limit),
    )(found_i32, cat_maps, explored)

    return goal_map, found


# ---------------------------------------------------------------------------
# Pure-numpy reference (mirrors the PyTorch module, cluster_filtering skipped)
# ---------------------------------------------------------------------------
def _reference_forward(map_features, goal_category):
    mf = np.asarray(map_features)
    gc = np.asarray(goal_category)
    B, C, M, _ = mf.shape
    goal_map = np.zeros((B, M, M), np.float32)
    found = np.zeros((B,), bool)

    def dilate(img, kernel):
        r = kernel.shape[-1] // 2
        pad = np.zeros((M + 2 * r, M + 2 * r), np.float32)
        pad[r:r + M, r:r + M] = img
        out = np.zeros((M, M), np.float32)
        for di in range(kernel.shape[-2]):
            for dj in range(kernel.shape[-1]):
                if kernel[0, 0, di, dj] > 0:
                    out += pad[di:di + M, dj:dj + M]
        return np.clip(out, 0.0, 1.0)

    for e in range(B):
        cm = mf[e, gc[e] + 8]
        mask = cm == 1.0
        if mask.sum() > 0:
            goal_map[e] = mask.astype(np.float32)
            found[e] = True
    for e in range(B):
        frontier = (mf[e, 1] == 0.0).astype(np.float32)
        frontier = 1.0 - dilate(1.0 - frontier, DILATE_EXPLORED_KERNEL)
        frontier = dilate(frontier, SELECT_BORDER_KERNEL) - frontier
        if not found[e]:
            goal_map[e] = frontier
    return goal_map, found


if __name__ == "__main__":
    B, num_sem, M = 2, 4, 16
    C = 8 + num_sem

    key = jax.random.PRNGKey(0)
    map_features = (jax.random.uniform(key, (B, C, M, M)) > 0.7).astype(
        jnp.float32)
    goal_category = jnp.array([0, 3], dtype=jnp.int32)
    # Batch 0: guarantee the goal channel has a mapped cell (found path).
    map_features = map_features.at[0, 0 + 8, 3, 4].set(1.0)
    # Batch 1: empty goal channel so the frontier/explore branch is exercised.
    map_features = map_features.at[1, 3 + 8].set(0.0)

    goal_map, found_goal = objectnav_frontier_forward(map_features,
                                                      goal_category)
    jax.block_until_ready((goal_map, found_goal))

    ref_goal, ref_found = _reference_forward(map_features, goal_category)
    assert np.allclose(np.asarray(goal_map), ref_goal, atol=1e-6), "goal_map mismatch"
    assert np.array_equal(np.asarray(found_goal), ref_found), "found_goal mismatch"

    print("KERNEL_OK")
</pallas_src>

<mosaic_0001>
module attributes {stable_mosaic.version = 11 : i64} {
  func.func @_policy_kernel(%arg0: i32, %arg1: memref<2xi32, #tpu.memory_space<smem>>, %arg2: memref<1x16x16xf32, #tpu.memory_space<vmem>>, %arg3: memref<1x16x16xf32, #tpu.memory_space<vmem>>, %arg4: memref<1x16x16xf32, #tpu.memory_space<vmem>>) attributes {dimension_semantics = [#tpu.dimension_semantics<parallel>], iteration_bounds = array<i64: 2>, scalar_prefetch = 1 : i64, scratch_operands = 0 : i64, tpu.core_type = #tpu.core_type<tc>, window_params = [{transform_indices = @transform_0, window_bounds = array<i64: 1, 16, 16>}, {transform_indices = @transform_1, window_bounds = array<i64: 1, 16, 16>}, {transform_indices = @transform_2, window_bounds = array<i64: 1, 16, 16>}]} {
    %0 = arith.index_cast %arg0 : i32 to index
    %1 = memref.load %arg1[%0] : memref<2xi32, #tpu.memory_space<smem>>
    %c0_i32 = arith.constant 0 : i32
    %2 = arith.cmpi ne, %1, %c0_i32 : i32
    %3 = arith.extui %2 : i1 to i32
    %c0_i32_0 = arith.constant 0 : i32
    %4 = arith.cmpi ne, %3, %c0_i32_0 : i32
    scf.if %4 {
      %c0 = arith.constant 0 : index
      %c0_2 = arith.constant 0 : index
      %c0_3 = arith.constant 0 : index
      %8 = vector.load %arg2[%c0, %c0_2, %c0_3] : memref<1x16x16xf32, #tpu.memory_space<vmem>>, vector<1x16x16xf32>
      %9 = vector.shape_cast %8 : vector<1x16x16xf32> to vector<16x16xf32>
      %cst = arith.constant 1.000000e+00 : f32
      %10 = vector.broadcast %cst : f32 to vector<16x16xf32>
      %11 = arith.cmpf oeq, %9, %10 : vector<16x16xf32>
      %cst_4 = arith.constant 1.000000e+00 : f32
      %cst_5 = arith.constant 0.000000e+00 : f32
      %12 = vector.broadcast %cst_4 : f32 to vector<16x16xf32>
      %13 = vector.broadcast %cst_5 : f32 to vector<16x16xf32>
      %14 = arith.select %11, %12, %13 : vector<16x16xi1>, vector<16x16xf32>
      %c0_6 = arith.constant 0 : index
      %c0_7 = arith.constant 0 : index
      %c0_8 = arith.constant 0 : index
      %15 = vector.load %arg4[%c0_6, %c0_7, %c0_8] : memref<1x16x16xf32, #tpu.memory_space<vmem>>, vector<1x16x16xf32>
      %16 = vector.shape_cast %15 : vector<1x16x16xf32> to vector<16x16xf32>
      %17 = vector.shape_cast %14 : vector<16x16xf32> to vector<1x16x16xf32>
      tpu.vector_store %arg4[%c0_6, %c0_7, %c0_8], %17 {strides = array<i32>} : memref<1x16x16xf32, #tpu.memory_space<vmem>>, vector<1x16x16xf32>,
    } else {
    }
    %true = arith.constant true
    %5 = arith.xori %2, %true : i1
    %6 = arith.extui %5 : i1 to i32
    %c0_i32_1 = arith.constant 0 : i32
    %7 = arith.cmpi ne, %6, %c0_i32_1 : i32
    scf.if %7 {
      %c0 = arith.constant 0 : index
      %c0_2 = arith.constant 0 : index
      %c0_3 = arith.constant 0 : index
      %8 = vector.load %arg3[%c0, %c0_2, %c0_3] : memref<1x16x16xf32, #tpu.memory_space<vmem>>, vector<1x16x16xf32>
      %9 = vector.shape_cast %8 : vector<1x16x16xf32> to vector<16x16xf32>
      %cst = arith.constant 0.000000e+00 : f32
      %10 = vector.broadcast %cst : f32 to vector<16x16xf32>
      %11 = arith.cmpf one, %9, %10 : vector<16x16xf32>
      %cst_4 = arith.constant 1.000000e+00 : f32
      %cst_5 = arith.constant 0.000000e+00 : f32
      %12 = vector.broadcast %cst_4 : f32 to vector<16x16xf32>
      %13 = vector.broadcast %cst_5 : f32 to vector<16x16xf32>
      %14 = arith.select %11, %12, %13 : vector<16x16xi1>, vector<16x16xf32>
      %15 = tpu.iota {dimensions = array<i32: 0>} : vector<16x16xi32>
      %16 = tpu.iota {dimensions = array<i32: 1>} : vector<16x16xi32>
      %17 = arith.subi %15, %16 : vector<16x16xi32>
      %18 = math.absi %17 : vector<16x16xi32>
      %19 = arith.truncf %14 : vector<16x16xf32> to vector<16x16xbf16>
      %c10_i32 = arith.constant 10 : i32
      %20 = vector.broadcast %c10_i32 : i32 to vector<16x16xi32>
      %21 = arith.cmpi sle, %18, %20 : vector<16x16xi32>
      %cst_6 = arith.constant 1.000000e+00 : f32
      %cst_7 = arith.constant 0.000000e+00 : f32
      %22 = vector.broadcast %cst_6 : f32 to vector<16x16xf32>
      %23 = vector.broadcast %cst_7 : f32 to vector<16x16xf32>
      %24 = arith.select %21, %22, %23 : vector<16x16xi1>, vector<16x16xf32>
      %25 = arith.truncf %24 : vector<16x16xf32> to vector<16x16xbf16>
      %cst_8 = arith.constant dense<0.000000e+00> : vector<16x16xf32>
      %26 = tpu.matmul %19, %25, %cst_8 {dimension_numbers = #tpu.dot_dimension_numbers<[1], [0], [0], [1], [0, 0, 1, 1], [], []>} : vector<16x16xbf16>, vector<16x16xbf16>, vector<16x16xf32> -> vector<16x16xf32>
      %c9_i32 = arith.constant 9 : i32
      %27 = vector.broadcast %c9_i32 : i32 to vector<16x16xi32>
      %28 = arith.cmpi sle, %18, %27 : vector<16x16xi32>
      %cst_9 = arith.constant 1.000000e+00 : f32
      %cst_10 = arith.constant 0.000000e+00 : f32
      %29 = vector.broadcast %cst_9 : f32 to vector<16x16xf32>
      %30 = vector.broadcast %cst_10 : f32 to vector<16x16xf32>
      %31 = arith.select %28, %29, %30 : vector<16x16xi1>, vector<16x16xf32>
      %32 = arith.subf %24, %31 : vector<16x16xf32>
      %33 = arith.truncf %32 : vector<16x16xf32> to vector<16x16xbf16>
      %cst_11 = arith.constant dense<0.000000e+00> : vector<16x16xf32>
      %34 = tpu.matmul %33, %19, %cst_11 {dimension_numbers = #tpu.dot_dimension_numbers<[1], [0], [0], [1], [0, 0, 1, 1], [], []>} : vector<16x16xbf16>, vector<16x16xbf16>, vector<16x16xf32> -> vector<16x16xf32>
      %35 = arith.addf %26, %34 : vector<16x16xf32>
      %c8_i32 = arith.constant 8 : i32
      %36 = vector.broadcast %c8_i32 : i32 to vector<16x16xi32>
      %37 = arith.cmpi sle, %18, %36 : vector<16x16xi32>
      %cst_12 = arith.constant 1.000000e+00 : f32
      %cst_13 = arith.constant 0.000000e+00 : f32
      %38 = vector.broadcast %cst_12 : f32 to vector<16x16xf32>
      %39 = vector.broadcast %cst_13 : f32 to vector<16x16xf32>
      %40 = arith.select %37, %38, %39 : vector<16x16xi1>, vector<16x16xf32>
      %41 = arith.subf %31, %40 : vector<16x16xf32>
      %42 = arith.truncf %41 : vector<16x16xf32> to vector<16x16xbf16>
      %c4_i32 = arith.constant 4 : i32
      %43 = vector.broadcast %c4_i32 : i32 to vector<16x16xi32>
      %44 = arith.cmpi sle, %18, %43 : vector<16x16xi32>
      %cst_14 = arith.constant 1.000000e+00 : f32
      %cst_15 = arith.constant 0.000000e+00 : f32
      %45 = vector.broadcast %cst_14 : f32 to vector<16x16xf32>
      %46 = vector.broadcast %cst_15 : f32 to vector<16x16xf32>
      %47 = arith.select %44, %45, %46 : vector<16x16xi1>, vector<16x16xf32>
      %48 = arith.truncf %47 : vector<16x16xf32> to vector<16x16xbf16>
      %cst_16 = arith.constant dense<0.000000e+00> : vector<16x16xf32>
      %49 = tpu.matmul %19, %48, %cst_16 {dimension_numbers = #tpu.dot_dimension_numbers<[1], [0], [0], [1], [0, 0, 1, 1], [], []>} : vector<16x16xbf16>, vector<16x16xbf16>, vector<16x16xf32> -> vector<16x16xf32>
      %50 = arith.truncf %49 : vector<16x16xf32> to vector<16x16xbf16>
      %cst_17 = arith.constant dense<0.000000e+00> : vector<16x16xf32>
      %51 = tpu.matmul %42, %50, %cst_17 {dimension_numbers = #tpu.dot_dimension_numbers<[1], [0], [0], [1], [0, 0, 1, 1], [], []>} : vector<16x16xbf16>, vector<16x16xbf16>, vector<16x16xf32> -> vector<16x16xf32>
      %52 = arith.addf %35, %51 : vector<16x16xf32>
      %c7_i32 = arith.constant 7 : i32
      %53 = vector.broadcast %c7_i32 : i32 to vector<16x16xi32>
      %54 = arith.cmpi sle, %18, %53 : vector<16x16xi32>
      %cst_18 = arith.constant 1.000000e+00 : f32
      %cst_19 = arith.constant 0.000000e+00 : f32
      %55 = vector.broadcast %cst_18 : f32 to vector<16x16xf32>
      %56 = vector.broadcast %cst_19 : f32 to vector<16x16xf32>
      %57 = arith.select %54, %55, %56 : vector<16x16xi1>, vector<16x16xf32>
      %58 = arith.subf %40, %57 : vector<16x16xf32>
      %59 = arith.truncf %58 : vector<16x16xf32> to vector<16x16xbf16>
      %c6_i32 = arith.constant 6 : i32
      %60 = vector.broadcast %c6_i32 : i32 to vector<16x16xi32>
      %61 = arith.cmpi sle, %18, %60 : vector<16x16xi32>
      %cst_20 = arith.constant 1.000000e+00 : f32
      %cst_21 = arith.constant 0.000000e+00 : f32
      %62 = vector.broadcast %cst_20 : f32 to vector<16x16xf32>
      %63 = vector.broadcast %cst_21 : f32 to vector<16x16xf32>
      %64 = arith.select %61, %62, %63 : vector<16x16xi1>, vector<16x16xf32>
      %65 = arith.truncf %64 : vector<16x16xf32> to vector<16x16xbf16>
      %cst_22 = arith.constant dense<0.000000e+00> : vector<16x16xf32>
      %66 = tpu.matmul %19, %65, %cst_22 {dimension_numbers = #tpu.dot_dimension_numbers<[1], [0], [0], [1], [0, 0, 1, 1], [], []>} : vector<16x16xbf16>, vector<16x16xbf16>, vector<16x16xf32> -> vector<16x16xf32>
      %67 = arith.truncf %66 : vector<16x16xf32> to vector<16x16xbf16>
      %cst_23 = arith.constant dense<0.000000e+00> : vector<16x16xf32>
      %68 = tpu.matmul %59, %67, %cst_23 {dimension_numbers = #tpu.dot_dimension_numbers<[1], [0], [0], [1], [0, 0, 1, 1], [], []>} : vector<16x16xbf16>, vector<16x16xbf16>, vector<16x16xf32> -> vector<16x16xf32>
      %69 = arith.addf %52, %68 : vector<16x16xf32>
      %70 = arith.subf %57, %64 : vector<16x16xf32>
      %71 = arith.truncf %70 : vector<16x16xf32> to vector<16x16xbf16>
      %72 = arith.truncf %57 : vector<16x16xf32> to vector<16x16xbf16>
      %cst_24 = arith.constant dense<0.000000e+00> : vector<16x16xf32>
      %73 = tpu.matmul %19, %72, %cst_24 {dimension_numbers = #tpu.dot_dimension_numbers<[1], [0], [0], [1], [0, 0, 1, 1], [], []>} : vector<16x16xbf16>, vector<16x16xbf16>, vector<16x16xf32> -> vector<16x16xf32>
      %74 = arith.truncf %73 : vector<16x16xf32> to vector<16x16xbf16>
      %cst_25 = arith.constant dense<0.000000e+00> : vector<16x16xf32>
      %75 = tpu.matmul %71, %74, %cst_25 {dimension_numbers = #tpu.dot_dimension_numbers<[1], [0], [0], [1], [0, 0, 1, 1], [], []>} : vector<16x16xbf16>, vector<16x16xbf16>, vector<16x16xf32> -> vector<16x16xf32>
      %76 = arith.addf %69, %75 : vector<16x16xf32>
      %77 = arith.subf %64, %47 : vector<16x16xf32>
      %78 = arith.truncf %77 : vector<16x16xf32> to vector<16x16xbf16>
      %79 = arith.truncf %40 : vector<16x16xf32> to vector<16x16xbf16>
      %cst_26 = arith.constant dense<0.000000e+00> : vector<16x16xf32>
      %80 = tpu.matmul %19, %79, %cst_26 {dimension_numbers = #tpu.dot_dimension_numbers<[1], [0], [0], [1], [0, 0, 1, 1], [], []>} : vector<16x16xbf16>, vector<16x16xbf16>, vector<16x16xf32> -> vector<16x16xf32>
      %81 = arith.truncf %80 : vector<16x16xf32> to vector<16x16xbf16>
      %cst_27 = arith.constant dense<0.000000e+00> : vector<16x16xf32>
      %82 = tpu.matmul %78, %81, %cst_27 {dimension_numbers = #tpu.dot_dimension_numbers<[1], [0], [0], [1], [0, 0, 1, 1], [], []>} : vector<16x16xbf16>, vector<16x16xbf16>, vector<16x16xf32> -> vector<16x16xf32>
      %83 = arith.addf %76, %82 : vector<16x16xf32>
      %c0_i32_28 = arith.constant 0 : i32
      %84 = vector.broadcast %c0_i32_28 : i32 to vector<16x16xi32>
      %85 = arith.cmpi sle, %18, %84 : vector<16x16xi32>
      %cst_29 = arith.constant 1.000000e+00 : f32
      %cst_30 = arith.constant 0.000000e+00 : f32
      %86 = vector.broadcast %cst_29 : f32 to vector<16x16xf32>
      %87 = vector.broadcast %cst_30 : f32 to vector<16x16xf32>
      %88 = arith.select %85, %86, %87 : vector<16x16xi1>, vector<16x16xf32>
      %89 = arith.subf %47, %88 : vector<16x16xf32>
      %90 = arith.truncf %89 : vector<16x16xf32> to vector<16x16xbf16>
      %91 = arith.truncf %31 : vector<16x16xf32> to vector<16x16xbf16>
      %cst_31 = arith.constant dense<0.000000e+00> : vector<16x16xf32>
      %92 = tpu.matmul %19, %91, %cst_31 {dimension_numbers = #tpu.dot_dimension_numbers<[1], [0], [0], [1], [0, 0, 1, 1], [], []>} : vector<16x16xbf16>, vector<16x16xbf16>, vector<16x16xf32> -> vector<16x16xf32>
      %93 = arith.truncf %92 : vector<16x16xf32> to vector<16x16xbf16>
      %cst_32 = arith.constant dense<0.000000e+00> : vector<16x16xf32>
      %94 = tpu.matmul %90, %93, %cst_32 {dimension_numbers = #tpu.dot_dimension_numbers<[1], [0], [0], [1], [0, 0, 1, 1], [], []>} : vector<16x16xbf16>, vector<16x16xbf16>, vector<16x16xf32> -> vector<16x16xf32>
      %95 = arith.addf %83, %94 : vector<16x16xf32>
      %cst_33 = arith.constant 0.000000e+00 : f32
      %cst_34 = arith.constant 1.000000e+00 : f32
      %96 = vector.broadcast %cst_33 : f32 to vector<16x16xf32>
      %97 = arith.maximumf %96, %95 : vector<16x16xf32>
      %98 = vector.broadcast %cst_34 : f32 to vector<16x16xf32>
      %99 = arith.minimumf %98, %97 : vector<16x16xf32>
      %cst_35 = arith.constant 1.000000e+00 : f32
      %100 = vector.broadcast %cst_35 : f32 to vector<16x16xf32>
      %101 = arith.subf %100, %99 : vector<16x16xf32>
      %102 = arith.truncf %101 : vector<16x16xf32> to vector<16x16xbf16>
      %c1_i32 = arith.constant 1 : i32
      %103 = vector.broadcast %c1_i32 : i32 to vector<16x16xi32>
      %104 = arith.cmpi sle, %18, %103 : vector<16x16xi32>
      %cst_36 = arith.constant 1.000000e+00 : f32
      %cst_37 = arith.constant 0.000000e+00 : f32
      %105 = vector.broadcast %cst_36 : f32 to vector<16x16xf32>
      %106 = vector.broadcast %cst_37 : f32 to vector<16x16xf32>
      %107 = arith.select %104, %105, %106 : vector<16x16xi1>, vector<16x16xf32>
      %108 = arith.truncf %107 : vector<16x16xf32> to vector<16x16xbf16>
      %cst_38 = arith.constant dense<0.000000e+00> : vector<16x16xf32>
      %109 = tpu.matmul %102, %108, %cst_38 {dimension_numbers = #tpu.dot_dimension_numbers<[1], [0], [0], [1], [0, 0, 1, 1], [], []>} : vector<16x16xbf16>, vector<16x16xbf16>, vector<16x16xf32> -> vector<16x16xf32>
      %110 = arith.subf %107, %88 : vector<16x16xf32>
      %111 = arith.truncf %110 : vector<16x16xf32> to vector<16x16xbf16>
      %cst_39 = arith.constant dense<0.000000e+00> : vector<16x16xf32>
      %112 = tpu.matmul %111, %102, %cst_39 {dimension_numbers = #tpu.dot_dimension_numbers<[1], [0], [0], [1], [0, 0, 1, 1], [], []>} : vector<16x16xbf16>, vector<16x16xbf16>, vector<16x16xf32> -> vector<16x16xf32>
      %113 = arith.addf %109, %112 : vector<16x16xf32>
      %cst_40 = arith.constant 0.000000e+00 : f32
      %cst_41 = arith.constant 1.000000e+00 : f32
      %114 = vector.broadcast %cst_40 : f32 to vector<16x16xf32>
      %115 = arith.maximumf %114, %113 : vector<16x16xf32>
      %116 = vector.broadcast %cst_41 : f32 to vector<16x16xf32>
      %117 = arith.minimumf %116, %115 : vector<16x16xf32>
      %118 = arith.subf %117, %101 : vector<16x16xf32>
      %c0_42 = arith.constant 0 : index
      %c0_43 = arith.constant 0 : index
      %c0_44 = arith.constant 0 : index
      %119 = vector.load %arg4[%c0_42, %c0_43, %c0_44] : memref<1x16x16xf32, #tpu.memory_space<vmem>>, vector<1x16x16xf32>
      %120 = vector.shape_cast %119 : vector<1x16x16xf32> to vector<16x16xf32>
      %121 = vector.shape_cast %118 : vector<16x16xf32> to vector<1x16x16xf32>
      tpu.vector_store %arg4[%c0_42, %c0_43, %c0_44], %121 {strides = array<i32>} : memref<1x16x16xf32, #tpu.memory_space<vmem>>, vector<1x16x16xf32>,
    } else {
    }
    return
  }
  func.func @transform_0(%arg0: i32, %arg1: memref<2xi32, #tpu.memory_space<smem>>) -> (i32, i32, i32) {
    %c0_i32 = arith.constant 0 : i32
    %c0_i32_0 = arith.constant 0 : i32
    %c0_i32_1 = arith.constant 0 : i32
    return %arg0, %c0_i32, %c0_i32_0 : i32, i32, i32
  }
  func.func @transform_1(%arg0: i32, %arg1: memref<2xi32, #tpu.memory_space<smem>>) -> (i32, i32, i32) {
    %c0_i32 = arith.constant 0 : i32
    %c0_i32_0 = arith.constant 0 : i32
    %c0_i32_1 = arith.constant 0 : i32
    return %arg0, %c0_i32, %c0_i32_0 : i32, i32, i32
  }
  func.func @transform_2(%arg0: i32, %arg1: memref<2xi32, #tpu.memory_space<smem>>) -> (i32, i32, i32) {
    %c0_i32 = arith.constant 0 : i32
    %c0_i32_0 = arith.constant 0 : i32
    %c0_i32_1 = arith.constant 0 : i32
    return %arg0, %c0_i32, %c0_i32_0 : i32, i32, i32
  }
}

</mosaic_0001>

<llo_original>
// kernel: tpu_custom_call.1
$region0: #{tpu_custom_call.1}
  #allocation0 [shape = 'u32[]', space=smem, size = 0x4, offset = 0x4, fixed_abs, tag = 'smem constant byte address 0x4 - core index']
  #allocation1 [shape = 'u32[72,128]{1,0:T(1,128)}', space=vmem, size = 0x9000, scoped, tag = 'internal scratch']
  #allocation2 [shape = 's32[1]{0}', space=sflag, size = 0x4, scoped, tag = 'scoped memory for tpu_custom_call.1']
  #allocation3 [shape = 'u8[512]{0}', space=smem, size = 0x200, scoped, tag = 'prefetched SMEM operand 0']
  %s0 = inlined_call_operand.hbm [shape: s32[2], index: 0, kind: input, shape index: {}]
  %s1 = inlined_call_operand.hbm [shape: f32[2,16,16], index: 1, kind: input, shape index: {}]
  %s2 = inlined_call_operand.hbm [shape: f32[2,16,16], index: 2, kind: input, shape index: {}]
  %s3 = inlined_call_operand.hbm [shape: f32[2,16,16], index: 3, kind: output, shape index: {}]
  %s4 = sld [smem:[#allocation0]]
  $region57: #{tpu_custom_call.1} parent=0
    _
  %s6 = ssub.s32 1, %s4
  %s7 = scalar_select 0, %s6, %s4
  %s9 = sshll.u32 %s0, 4
  %s10 = int_to_ptr.hbm [resolvable:$true] %s9
  %12 = dma.hbm_to_smem %s10, 16, [#allocation3], [#allocation2]
  %14 = dma.done [#allocation2], 16
  %15 = sfence
  $region1: #{tpu_custom_call.1} parent=0
    #allocation4 [shape = 'u8[16384]{0}', space=vmem, size = 0x4000, scoped, tag = 'input window, operand 1']
    #allocation5 [shape = 's32[2]{0}', space=sflag, size = 0x8, scoped, tag = 'scoped memory for tpu_custom_call.1']
    #allocation6 [shape = 's32[2]{0}', space=sflag, size = 0x8, scoped, tag = 'scoped memory for tpu_custom_call.1']
    #allocation7 [shape = 'u8[16384]{0}', space=vmem, size = 0x4000, scoped, tag = 'input window, operand 2']
    #allocation8 [shape = 's32[2]{0}', space=sflag, size = 0x8, scoped, tag = 'scoped memory for tpu_custom_call.1']
    #allocation9 [shape = 'u8[16384]{0}', space=vmem, size = 0x4000, scoped, tag = 'output window, operand 0']
    %16 = vsyncpa [#allocation5], 0
    %s17 = scalar_lea.sflag [#allocation5], 1
    %18 = vsyncpa %s17, 0
    %19 = vsyncpa [#allocation8], 0
    %s20 = scalar_lea.sflag [#allocation8], 1
    %21 = vsyncpa %s20, 0
    %22 = vsyncpa [#allocation6], 0
    %s23 = scalar_lea.sflag [#allocation6], 1
    %24 = vsyncpa %s23, 0
    loop: start=0, step=1, limit=4
    $region2: #{tpu_custom_call.1} parent=1 // loop_pre_header
      _
    $region3: #{tpu_custom_call.1} parent=1 // loop_header
      %s26 = sphi 0, %s30
      %p27 = scmp.ge.s32.totalorder %s26, 4
      %s36 = sphi 0, %s38
      %s39 = sphi 0, %s36
      %s40 = sphi 0, %s39
      %s56 = sphi 0, %s40
      %s62 = sphi 0, %s64
      %s65 = sphi 0, %s62
      %s66 = sphi 0, %s65
      %s82 = sphi 0, %s66
      %s88 = sphi 0, %s90
      %s91 = sphi 0, %s88
      %s92 = sphi 0, %s91
      %s108 = sphi 0, %s92
    $region4: #{tpu_custom_call.1} parent=1 // loop_header_branch
      %29 = sbr.rel (%p27) target = $region8
    $region5: #{tpu_custom_call.1} parent=1 // loop_body
      %s31 = ssub.s32 %s26, 1
      %s32 = ssub.s32 %s26, 2
      %s33 = sadd.s32 %s26, 1
      %s34 = ssub.s32 %s26, %s33
      %p35 = scmp.eq.s32.totalorder %s34, 0
      %s37 = sadd.s32 %s36, 1
      %s38 = scalar_select %p35, %s36, %s37
      %p41 = pneg %p35
      %p42 = scmp.eq.s32.totalorder %s26, 1
      %p43 = por %p41, %p42
      %p44 = scmp.ne.s32.totalorder %s36, %s39
      %p45 = scmp.eq.s32.totalorder %s26, 0
      %p46 = por %p44, %p45
      %p47 = scmp.ne.s32.totalorder %s36, %s39
      %p48 = scmp.eq.s32.totalorder %s31, 1
      %p49 = por %p47, %p48
      %p50 = scmp.ne.s32.totalorder %s39, %s40
      %p51 = scmp.eq.s32.totalorder %s31, 0
      %p52 = por %p50, %p51
      %p53 = scmp.ne.s32.totalorder %s39, %s40
      %p54 = scmp.eq.s32.totalorder %s32, 1
      %p55 = por %p53, %p54
      %p57 = scmp.ne.s32.totalorder %s40, %s56
      %p58 = scmp.eq.s32.totalorder %s32, 0
      %p59 = por %p57, %p58
      %s60 = ssub.s32 %s26, %s33
      %p61 = scmp.eq.s32.totalorder %s60, 0
      %s63 = sadd.s32 %s62, 1
      %s64 = scalar_select %p61, %s62, %s63
      %p67 = pneg %p61
      %p68 = scmp.eq.s32.totalorder %s26, 1
      %p69 = por %p67, %p68
      %p70 = scmp.ne.s32.totalorder %s62, %s65
      %p71 = scmp.eq.s32.totalorder %s26, 0
      %p72 = por %p70, %p71
      %p73 = scmp.ne.s32.totalorder %s62, %s65
      %p74 = scmp.eq.s32.totalorder %s31, 1
      %p75 = por %p73, %p74
      %p76 = scmp.ne.s32.totalorder %s65, %s66
      %p77 = scmp.eq.s32.totalorder %s31, 0
      %p78 = por %p76, %p77
      %p79 = scmp.ne.s32.totalorder %s65, %s66
      %p80 = scmp.eq.s32.totalorder %s32, 1
      %p81 = por %p79, %p80
      %p83 = scmp.ne.s32.totalorder %s66, %s82
      %p84 = scmp.eq.s32.totalorder %s32, 0
      %p85 = por %p83, %p84
      %s86 = ssub.s32 %s26, %s33
      %p87 = scmp.eq.s32.totalorder %s86, 0
      %s89 = sadd.s32 %s88, 1
      %s90 = scalar_select %p87, %s88, %s89
      %p93 = pneg %p87
      %p94 = scmp.eq.s32.totalorder %s26, 1
      %p95 = por %p93, %p94
      %p96 = scmp.ne.s32.totalorder %s88, %s91
      %p97 = scmp.eq.s32.totalorder %s26, 0
      %p98 = por %p96, %p97
      %p99 = scmp.ne.s32.totalorder %s88, %s91
      %p100 = scmp.eq.s32.totalorder %s31, 1
      %p101 = por %p99, %p100
      %p102 = scmp.ne.s32.totalorder %s91, %s92
      %p103 = scmp.eq.s32.totalorder %s31, 0
      %p104 = por %p102, %p103
      %p105 = scmp.ne.s32.totalorder %s91, %s92
      %p106 = scmp.eq.s32.totalorder %s32, 1
      %p107 = por %p105, %p106
      %p109 = scmp.ne.s32.totalorder %s92, %s108
      %p110 = scmp.eq.s32.totalorder %s32, 0
      %p111 = por %p109, %p110
      %p112 = scmp.le.s32.totalorder 1, %s26
      %p113 = scmp.lt.s32.totalorder %s26, 3
      %p114 = pnand %p112, %p113
      %p115 = pneg %p114
      // Predicated region
      $region9: #{tpu_custom_call.1} parent=5 // pred_check
        _
      $region10: #{tpu_custom_call.1} parent=5 // pred_check_branch
        %117 = sbr.rel (%p114) target = $region12
      $region11: #{tpu_custom_call.1} parent=5 // pred_region
        %s118 = ssub.s32 %s26, 1
      $region12: #{tpu_custom_call.1} parent=5 // pred_fallthru
        _
      %p119 = scmp.lt.s32.totalorder %s26, 2
      // Predicated region
      $region13: #{tpu_custom_call.1} parent=5 // pred_check
        %p120 = pneg %p119
      $region14: #{tpu_custom_call.1} parent=5 // pred_check_branch
        %122 = sbr.rel (%p120) target = $region16
      $region15: #{tpu_custom_call.1} parent=5 // pred_region
        // Predicated region
        $region17: #{tpu_custom_call.1} parent=15 // pred_check
          %p123 = pneg %p46
        $region18: #{tpu_custom_call.1} parent=15 // pred_check_branch
          %125 = sbr.rel (%p123) target = $region20
        $region19: #{tpu_custom_call.1} parent=15 // pred_region
          %s126 = sand.u32 %s36, 1
          %s127 = scalar_lea.sflag [#allocation5], %s126
          %s128 = sand.u32 %s36, 1
          %s129 = smul.addr %s128, 16
          %s130 = scalar_lea.vmem [#allocation4], %s129
          %132 = vsyncadd %s127, 0
          %s133 = smul.addr %s26, 2
          %s134 = smul.addr %s133, 8
          %s135 = scalar_lea.hbm %s1, %s134
          %s136 = sshll.u32 %s135, 4
          %s137 = int_to_ptr.hbm [resolvable:$true] %s136
          %s138 = sshll.u32 %s130, 4
          %s139 = int_to_ptr.vmem [resolvable:$true] %s138
          %144 = dma.hbm_to_vmem [thread:$0]  %s137, 256, %s139, %s127, 128, 128, 8
        $region20: #{tpu_custom_call.1} parent=15 // pred_fallthru
          _
        // Predicated region
        $region21: #{tpu_custom_call.1} parent=15 // pred_check
          %p145 = pneg %p72
        $region22: #{tpu_custom_call.1} parent=15 // pred_check_branch
          %147 = sbr.rel (%p145) target = $region24
        $region23: #{tpu_custom_call.1} parent=15 // pred_region
          %s148 = sand.u32 %s62, 1
          %s149 = scalar_lea.sflag [#allocation8], %s148
          %s150 = sand.u32 %s62, 1
          %s151 = smul.addr %s150, 16
          %s152 = scalar_lea.vmem [#allocation7], %s151
          %154 = vsyncadd %s149, 0
          %s155 = smul.addr %s26, 2
          %s156 = smul.addr %s155, 8
          %s157 = scalar_lea.hbm %s2, %s156
          %s158 = sshll.u32 %s157, 4
          %s159 = int_to_ptr.hbm [resolvable:$true] %s158
          %s160 = sshll.u32 %s152, 4
          %s161 = int_to_ptr.vmem [resolvable:$true] %s160
          %166 = dma.hbm_to_vmem [thread:$0]  %s159, 256, %s161, %s149, 128, 128, 8
        $region24: #{tpu_custom_call.1} parent=15 // pred_fallthru
          _
      $region16: #{tpu_custom_call.1} parent=5 // pred_fallthru
        _
      %p167 = scmp.le.s32.totalorder 1, %s26
      %p168 = scmp.lt.s32.totalorder %s26, 3
      %p169 = pnand %p167, %p168
      %p170 = pneg %p169
      // Predicated region
      $region25: #{tpu_custom_call.1} parent=5 // pred_check
        _
      $region26: #{tpu_custom_call.1} parent=5 // pred_check_branch
        %172 = sbr.rel (%p169) target = $region28
      $region27: #{tpu_custom_call.1} parent=5 // pred_region
        %s173 = ssub.s32 %s26, 1
        %s174 = sand.u32 %s39, 1
        %s175 = scalar_lea.sflag [#allocation5], %s174
        %s176 = sand.u32 %s39, 1
        %s177 = smul.addr %s176, 16
        %s178 = scalar_lea.vmem [#allocation4], %s177
        // Predicated region
        $region29: #{tpu_custom_call.1} parent=27 // pred_check
          %p179 = pneg %p52
        $region30: #{tpu_custom_call.1} parent=27 // pred_check_branch
          %181 = sbr.rel (%p179) target = $region32
        $region31: #{tpu_custom_call.1} parent=27 // pred_region
          %183 = dma.done %s175, 256
        $region32: #{tpu_custom_call.1} parent=27 // pred_fallthru
          _
        %s184 = sand.u32 %s65, 1
        %s185 = scalar_lea.sflag [#allocation8], %s184
        %s186 = sand.u32 %s65, 1
        %s187 = smul.addr %s186, 16
        %s188 = scalar_lea.vmem [#allocation7], %s187
        // Predicated region
        $region33: #{tpu_custom_call.1} parent=27 // pred_check
          %p189 = pneg %p78
        $region34: #{tpu_custom_call.1} parent=27 // pred_check_branch
          %191 = sbr.rel (%p189) target = $region36
        $region35: #{tpu_custom_call.1} parent=27 // pred_region
          %193 = dma.done %s185, 256
        $region36: #{tpu_custom_call.1} parent=27 // pred_fallthru
          _
        %s194 = sand.u32 %s39, 1
        %s195 = scalar_lea.sflag [#allocation5], %s194
        %s196 = sand.u32 %s39, 1
        %s197 = smul.addr %s196, 16
        %s198 = scalar_lea.vmem [#allocation4], %s197
        %p199 = pneg %p52
        %p200 = pneg %p49
        %s201 = sand.u32 %s65, 1
        %s202 = scalar_lea.sflag [#allocation8], %s201
        %s203 = sand.u32 %s65, 1
        %s204 = smul.addr %s203, 16
        %s205 = scalar_lea.vmem [#allocation7], %s204
        %p206 = pneg %p78
        %p207 = pneg %p75
        %p208 = pneg %p104
        %p209 = pneg %p101
        %s210 = sand.u32 %s91, 1
        %s211 = scalar_lea.sflag [#allocation6], %s210
        %s212 = sand.u32 %s91, 1
        %s213 = smul.addr %s212, 16
        %s214 = scalar_lea.vmem [#allocation9], %s213
        %s216 = sld [smem:[#allocation3 + %s31]]
        %p217 = scmp.ne.s32.totalorder %s216, 0
        // Predicated region
        $region37: #{tpu_custom_call.1} parent=27 // pred_check
          %p218 = pneg %p217
        $region38: #{tpu_custom_call.1} parent=27 // pred_check_branch
          %220 = sbr.rel (%p218) target = $region40
        $region39: #{tpu_custom_call.1} parent=27 // pred_region
          %v221 = vld [vmem:[%s178] sm:$0xff]
          %v222 = vld [vmem:[%s178 + $0x8] sm:$0xff]
          %vm223 = vcmp.eq.f32.partialorder %v221, 1.0
          %vm224 = vcmp.eq.f32.partialorder %v222, 1.0
          %v225 = vsel %vm223, 1.0, 0.0
          %v226 = vsel %vm224, 1.0, 0.0
          %vm227 = vcmask 130048
          %228 = vst.msk [vmem:[%s214] sm:$0xff] %vm227, %v225
          %229 = vst.msk [vmem:[%s214 + $0x8] sm:$0xff] %vm227, %v226
        $region40: #{tpu_custom_call.1} parent=27 // pred_fallthru
          _
        %p230 = scmp.eq.s32.totalorder %s216, 0
        // Predicated region
        $region41: #{tpu_custom_call.1} parent=27 // pred_check
          %p231 = pneg %p230
        $region42: #{tpu_custom_call.1} parent=27 // pred_check_branch
          %233 = sbr.rel (%p231) target = $region44
        $region43: #{tpu_custom_call.1} parent=27 // pred_region
          %v234 = vld [vmem:[%s188] sm:$0xff]
          %v235 = vld [vmem:[%s188 + $0x8] sm:$0xff]
          %vm236 = vcmp.ne.f32.partialorder %v234, 0.0
          %vm237 = vcmp.ne.f32.partialorder %v235, 0.0
          %v238 = vsel %vm236, 1.0, 0.0
          %v239 = vsel %vm237, 1.0, 0.0
          %v240 = vlaneseq
          %v241 = vshrl.u32 %v240, 7
          %v242 = vadd.s32 %v241, 8
          %v243 = vlaneseq
          %v244 = vand.u32 %v243, 127
          %v245 = vsub.s32 %v241, %v244
          %v246 = vsub.s32 %v242, %v244
          %vm247 = vcmp.lt.s32.totalorder %v245, 0
          %v248 = vsub.s32 0, %v245
          %v249 = vsel %vm247, %v248, %v245
          %vm250 = vcmp.lt.s32.totalorder %v246, 0
          %v251 = vsub.s32 0, %v246
          %v252 = vsel %vm250, %v251, %v246
          %v253 = vpack.c.bf16 %v239, %v238
          %vm254 = vcmp.le.s32.totalorder %v249, 10
          %vm255 = vcmp.le.s32.totalorder %v252, 10
          %v256 = vsel %vm254, 1.0, 0.0
          %v257 = vsel %vm255, 1.0, 0.0
          %v258 = vpack.c.bf16 %v257, %v256
          %vm259 = vcmp.le.s32.totalorder %v249, 9
          %vm260 = vcmp.le.s32.totalorder %v252, 9
          %v261 = vsel %vm259, 1.0, 0.0
          %v262 = vsel %vm260, 1.0, 0.0
          %v263 = vsub.f32 %v256, %v261
          %v264 = vsub.f32 %v257, %v262
          %v265 = vpack.c.bf16 %v264, %v263
          %vm266 = vcmask 130048
          %v268 = vsel %vm266, %v265, 0
          %270 = vmatpush.bf16.msra.mxu0 0
          %271 = vmatpush.bf16.msra.mxu0 0
          %272 = vmatpush.bf16.msra.mxu0 0
          %273 = vmatpush.bf16.msra.mxu0 0
          %274 = vmatpush.bf16.msra.mxu0 0
          %275 = vmatpush.bf16.msra.mxu0 0
          %276 = vmatpush.bf16.msra.mxu0 0
          %277 = vmatpush.bf16.msra.mxu0 %v253
          %278 = vmatmul.bf16.gmra.mxu0 %v268
          %v279 = vpop.f32.mrf.mxu0
          %v280 = vadd.f32 0.0, %v279
          %v281 = vpop.f32.mrf.mxu0
          %v282 = vadd.f32 0.0, %v281
          %283 = vdwg.mxu0
          %v285 = vsel %vm266, %v253, 0
          %287 = vmatpush.bf16.msra.mxu0 0
          %288 = vmatpush.bf16.msra.mxu0 0
          %289 = vmatpush.bf16.msra.mxu0 0
          %290 = vmatpush.bf16.msra.mxu0 0
          %291 = vmatpush.bf16.msra.mxu0 0
          %292 = vmatpush.bf16.msra.mxu0 0
          %293 = vmatpush.bf16.msra.mxu0 0
          %294 = vmatpush.bf16.msra.mxu0 %v258
          %295 = vmatmul.bf16.gmra.mxu0 %v285
          %v296 = vpop.f32.mrf.mxu0
          %v297 = vadd.f32 %v280, %v296
          %v298 = vpop.f32.mrf.mxu0
          %v299 = vadd.f32 %v282, %v298
          %300 = vdwg.mxu0
          %vm301 = vcmp.le.s32.totalorder %v249, 8
          %vm302 = vcmp.le.s32.totalorder %v252, 8
          %v303 = vsel %vm301, 1.0, 0.0
          %v304 = vsel %vm302, 1.0, 0.0
          %v305 = vsub.f32 %v261, %v303
          %v306 = vsub.f32 %v262, %v304
          %v307 = vpack.c.bf16 %v306, %v305
          %vm308 = vcmp.le.s32.totalorder %v249, 4
          %vm309 = vcmp.le.s32.totalorder %v252, 4
          %v310 = vsel %vm308, 1.0, 0.0
          %v311 = vsel %vm309, 1.0, 0.0
          %v312 = vpack.c.bf16 %v311, %v310
          %313 = vmatpush.bf16.msra.mxu0 0
          %314 = vmatpush.bf16.msra.mxu0 0
          %315 = vmatpush.bf16.msra.mxu0 0
          %316 = vmatpush.bf16.msra.mxu0 0
          %317 = vmatpush.bf16.msra.mxu0 0
          %318 = vmatpush.bf16.msra.mxu0 0
          %319 = vmatpush.bf16.msra.mxu0 0
          %320 = vmatpush.bf16.msra.mxu0 %v312
          %321 = vmatmul.bf16.gmra.mxu0 %v285
          %v322 = vpop.f32.mrf.mxu0
          %v323 = vadd.f32 0.0, %v322
          %v324 = vpop.f32.mrf.mxu0
          %v325 = vadd.f32 0.0, %v324
          %326 = vdwg.mxu0
          %v327 = vpack.c.bf16 %v325, %v323
          %v329 = vsel %vm266, %v307, 0
          %331 = vmatpush.bf16.msra.mxu0 0
          %332 = vmatpush.bf16.msra.mxu0 0
          %333 = vmatpush.bf16.msra.mxu0 0
          %334 = vmatpush.bf16.msra.mxu0 0
          %335 = vmatpush.bf16.msra.mxu0 0
          %336 = vmatpush.bf16.msra.mxu0 0
          %337 = vmatpush.bf16.msra.mxu0 0
          %338 = vmatpush.bf16.msra.mxu0 %v327
          %339 = vmatmul.bf16.gmra.mxu0 %v329
          %v340 = vpop.f32.mrf.mxu0
          %v341 = vadd.f32 0.0, %v340
          %v342 = vpop.f32.mrf.mxu0
          %v343 = vadd.f32 0.0, %v342
          %344 = vdwg.mxu0
          %v345 = vadd.f32 %v297, %v341
          %v346 = vadd.f32 %v299, %v343
          %vm347 = vcmp.le.s32.totalorder %v249, 7
          %vm348 = vcmp.le.s32.totalorder %v252, 7
          %v349 = vsel %vm347, 1.0, 0.0
          %v350 = vsel %vm348, 1.0, 0.0
          %v351 = vsub.f32 %v303, %v349
          %v352 = vsub.f32 %v304, %v350
          %v353 = vpack.c.bf16 %v352, %v351
          %vm354 = vcmp.le.s32.totalorder %v249, 6
          %vm355 = vcmp.le.s32.totalorder %v252, 6
          %v356 = vsel %vm354, 1.0, 0.0
          %v357 = vsel %vm355, 1.0, 0.0
          %v358 = vpack.c.bf16 %v357, %v356
          %359 = vmatpush.bf16.msra.mxu0 0
          %360 = vmatpush.bf16.msra.mxu0 0
          %361 = vmatpush.bf16.msra.mxu0 0
          %362 = vmatpush.bf16.msra.mxu0 0
          %363 = vmatpush.bf16.msra.mxu0 0
          %364 = vmatpush.bf16.msra.mxu0 0
          %365 = vmatpush.bf16.msra.mxu0 0
          %366 = vmatpush.bf16.msra.mxu0 %v358
          %367 = vmatmul.bf16.gmra.mxu0 %v285
          %v368 = vpop.f32.mrf.mxu0
          %v369 = vadd.f32 0.0, %v368
          %v370 = vpop.f32.mrf.mxu0
          %v371 = vadd.f32 0.0, %v370
          %372 = vdwg.mxu0
          %v373 = vpack.c.bf16 %v371, %v369
          %v375 = vsel %vm266, %v353, 0
          %377 = vmatpush.bf16.msra.mxu0 0
          %378 = vmatpush.bf16.msra.mxu0 0
          %379 = vmatpush.bf16.msra.mxu0 0
          %380 = vmatpush.bf16.msra.mxu0 0
          %381 = vmatpush.bf16.msra.mxu0 0
          %382 = vmatpush.bf16.msra.mxu0 0
          %383 = vmatpush.bf16.msra.mxu0 0
          %384 = vmatpush.bf16.msra.mxu0 %v373
          %385 = vmatmul.bf16.gmra.mxu0 %v375
          %v386 = vpop.f32.mrf.mxu0
          %v387 = vadd.f32 0.0, %v386
          %v388 = vpop.f32.mrf.mxu0
          %v389 = vadd.f32 0.0, %v388
          %390 = vdwg.mxu0
          %v391 = vadd.f32 %v345, %v387
          %v392 = vadd.f32 %v346, %v389
          %v393 = vsub.f32 %v349, %v356
          %v394 = vsub.f32 %v350, %v357
          %v395 = vpack.c.bf16 %v394, %v393
          %v396 = vpack.c.bf16 %v350, %v349
          %397 = vmatpush.bf16.msra.mxu0 0
          %398 = vmatpush.bf16.msra.mxu0 0
          %399 = vmatpush.bf16.msra.mxu0 0
          %400 = vmatpush.bf16.msra.mxu0 0
          %401 = vmatpush.bf16.msra.mxu0 0
          %402 = vmatpush.bf16.msra.mxu0 0
          %403 = vmatpush.bf16.msra.mxu0 0
          %404 = vmatpush.bf16.msra.mxu0 %v396
          %405 = vmatmul.bf16.gmra.mxu0 %v285
          %v406 = vpop.f32.mrf.mxu0
          %v407 = vadd.f32 0.0, %v406
          %v408 = vpop.f32.mrf.mxu0
          %v409 = vadd.f32 0.0, %v408
          %410 = vdwg.mxu0
          %v411 = vpack.c.bf16 %v409, %v407
          %v413 = vsel %vm266, %v395, 0
          %415 = vmatpush.bf16.msra.mxu0 0
          %416 = vmatpush.bf16.msra.mxu0 0
          %417 = vmatpush.bf16.msra.mxu0 0
          %418 = vmatpush.bf16.msra.mxu0 0
          %419 = vmatpush.bf16.msra.mxu0 0
          %420 = vmatpush.bf16.msra.mxu0 0
          %421 = vmatpush.bf16.msra.mxu0 0
          %422 = vmatpush.bf16.msra.mxu0 %v411
          %423 = vmatmul.bf16.gmra.mxu0 %v413
          %v424 = vpop.f32.mrf.mxu0
          %v425 = vadd.f32 0.0, %v424
          %v426 = vpop.f32.mrf.mxu0
          %v427 = vadd.f32 0.0, %v426
          %428 = vdwg.mxu0
          %v429 = vadd.f32 %v391, %v425
          %v430 = vadd.f32 %v392, %v427
          %v431 = vsub.f32 %v356, %v310
          %v432 = vsub.f32 %v357, %v311
          %v433 = vpack.c.bf16 %v432, %v431
          %v434 = vpack.c.bf16 %v304, %v303
          %435 = vmatpush.bf16.msra.mxu0 0
          %436 = vmatpush.bf16.msra.mxu0 0
          %437 = vmatpush.bf16.msra.mxu0 0
          %438 = vmatpush.bf16.msra.mxu0 0
          %439 = vmatpush.bf16.msra.mxu0 0
          %440 = vmatpush.bf16.msra.mxu0 0
          %441 = vmatpush.bf16.msra.mxu0 0
          %442 = vmatpush.bf16.msra.mxu0 %v434
          %443 = vmatmul.bf16.gmra.mxu0 %v285
          %v444 = vpop.f32.mrf.mxu0
          %v445 = vadd.f32 0.0, %v444
          %v446 = vpop.f32.mrf.mxu0
          %v447 = vadd.f32 0.0, %v446
          %448 = vdwg.mxu0
          %v449 = vpack.c.bf16 %v447, %v445
          %v451 = vsel %vm266, %v433, 0
          %453 = vmatpush.bf16.msra.mxu0 0
          %454 = vmatpush.bf16.msra.mxu0 0
          %455 = vmatpush.bf16.msra.mxu0 0
          %456 = vmatpush.bf16.msra.mxu0 0
          %457 = vmatpush.bf16.msra.mxu0 0
          %458 = vmatpush.bf16.msra.mxu0 0
          %459 = vmatpush.bf16.msra.mxu0 0
          %460 = vmatpush.bf16.msra.mxu0 %v449
          %461 = vmatmul.bf16.gmra.mxu0 %v451
          %v462 = vpop.f32.mrf.mxu0
          %v463 = vadd.f32 0.0, %v462
          %v464 = vpop.f32.mrf.mxu0
          %v465 = vadd.f32 0.0, %v464
          %466 = vdwg.mxu0
          %v467 = vadd.f32 %v429, %v463
          %v468 = vadd.f32 %v430, %v465
          %vm469 = vcmp.le.s32.totalorder %v249, 0
          %vm470 = vcmp.le.s32.totalorder %v252, 0
          %v471 = vsel %vm469, 1.0, 0.0
          %v472 = vsel %vm470, 1.0, 0.0
          %v473 = vsub.f32 %v310, %v471
          %v474 = vsub.f32 %v311, %v472
          %v475 = vpack.c.bf16 %v474, %v473
          %v476 = vpack.c.bf16 %v262, %v261
          %477 = vmatpush.bf16.msra.mxu0 0
          %478 = vmatpush.bf16.msra.mxu0 0
          %479 = vmatpush.bf16.msra.mxu0 0
          %480 = vmatpush.bf16.msra.mxu0 0
          %481 = vmatpush.bf16.msra.mxu0 0
          %482 = vmatpush.bf16.msra.mxu0 0
          %483 = vmatpush.bf16.msra.mxu0 0
          %484 = vmatpush.bf16.msra.mxu0 %v476
          %485 = vmatmul.bf16.gmra.mxu0 %v285
          %v486 = vpop.f32.mrf.mxu0
          %v487 = vadd.f32 0.0, %v486
          %v488 = vpop.f32.mrf.mxu0
          %v489 = vadd.f32 0.0, %v488
          %490 = vdwg.mxu0
          %v491 = vpack.c.bf16 %v489, %v487
          %v493 = vsel %vm266, %v475, 0
          %495 = vmatpush.bf16.msra.mxu0 0
          %496 = vmatpush.bf16.msra.mxu0 0
          %497 = vmatpush.bf16.msra.mxu0 0
          %498 = vmatpush.bf16.msra.mxu0 0
          %499 = vmatpush.bf16.msra.mxu0 0
          %500 = vmatpush.bf16.msra.mxu0 0
          %501 = vmatpush.bf16.msra.mxu0 0
          %502 = vmatpush.bf16.msra.mxu0 %v491
          %503 = vmatmul.bf16.gmra.mxu0 %v493
          %v504 = vpop.f32.mrf.mxu0
          %v505 = vadd.f32 0.0, %v504
          %v506 = vpop.f32.mrf.mxu0
          %v507 = vadd.f32 0.0, %v506
          %508 = vdwg.mxu0
          %v509 = vadd.f32 %v467, %v505
          %v510 = vadd.f32 %v468, %v507
          %v511 = vmax.f32 %v509, 0.0
          %v512 = vmax.f32 %v510, 0.0
          %v513 = vmin.f32 %v511, 1.0
          %v514 = vmin.f32 %v512, 1.0
          %v515 = vsub.f32 1.0, %v513
          %v516 = vsub.f32 1.0, %v514
          %v517 = vpack.c.bf16 %v516, %v515
          %vm518 = vcmp.le.s32.totalorder %v249, 1
          %vm519 = vcmp.le.s32.totalorder %v252, 1
          %v520 = vsel %vm518, 1.0, 0.0
          %v521 = vsel %vm519, 1.0, 0.0
          %v522 = vpack.c.bf16 %v521, %v520
          %v523 = vsub.f32 %v520, %v471
          %v524 = vsub.f32 %v521, %v472
          %v525 = vpack.c.bf16 %v524, %v523
          %v527 = vsel %vm266, %v525, 0
          %529 = vmatpush.bf16.msra.mxu0 0
          %530 = vmatpush.bf16.msra.mxu0 0
          %531 = vmatpush.bf16.msra.mxu0 0
          %532 = vmatpush.bf16.msra.mxu0 0
          %533 = vmatpush.bf16.msra.mxu0 0
          %534 = vmatpush.bf16.msra.mxu0 0
          %535 = vmatpush.bf16.msra.mxu0 0
          %536 = vmatpush.bf16.msra.mxu0 %v517
          %537 = vmatmul.bf16.gmra.mxu0 %v527
          %v538 = vpop.f32.mrf.mxu0
          %v539 = vadd.f32 0.0, %v538
          %v540 = vpop.f32.mrf.mxu0
          %v541 = vadd.f32 0.0, %v540
          %542 = vdwg.mxu0
          %v544 = vsel %vm266, %v517, 0
          %546 = vmatpush.bf16.msra.mxu0 0
          %547 = vmatpush.bf16.msra.mxu0 0
          %548 = vmatpush.bf16.msra.mxu0 0
          %549 = vmatpush.bf16.msra.mxu0 0
          %550 = vmatpush.bf16.msra.mxu0 0
          %551 = vmatpush.bf16.msra.mxu0 0
          %552 = vmatpush.bf16.msra.mxu0 0
          %553 = vmatpush.bf16.msra.mxu0 %v522
          %554 = vmatmul.bf16.gmra.mxu0 %v544
          %v555 = vpop.f32.mrf.mxu0
          %v556 = vadd.f32 %v539, %v555
          %v557 = vpop.f32.mrf.mxu0
          %v558 = vadd.f32 %v541, %v557
          %559 = vdwg.mxu0
          %v560 = vmax.f32 %v556, 0.0
          %v561 = vmax.f32 %v558, 0.0
          %v562 = vmin.f32 %v560, 1.0
          %v563 = vmin.f32 %v561, 1.0
          %v564 = vsub.f32 %v562, %v515
          %v565 = vsub.f32 %v563, %v516
          %566 = vst.msk [vmem:[%s214] sm:$0xff] %vm266, %v564
          %567 = vst.msk [vmem:[%s214 + $0x8] sm:$0xff] %vm266, %v565
        $region44: #{tpu_custom_call.1} parent=27 // pred_fallthru
          _
        %s568 = sand.u32 %s91, 1
        %s569 = scalar_lea.sflag [#allocation6], %s568
        %s570 = sand.u32 %s91, 1
        %s571 = smul.addr %s570, 16
        %s572 = scalar_lea.vmem [#allocation9], %s571
        // Predicated region
        $region45: #{tpu_custom_call.1} parent=27 // pred_check
          %p573 = pneg %p101
        $region46: #{tpu_custom_call.1} parent=27 // pred_check_branch
          %575 = sbr.rel (%p573) target = $region48
        $region47: #{tpu_custom_call.1} parent=27 // pred_region
          %577 = vsyncadd %s569, 0
          %s578 = smul.addr %s31, 2
          %s579 = smul.addr %s578, 8
          %s580 = scalar_lea.hbm %s3, %s579
          %s581 = sshll.u32 %s572, 4
          %s582 = int_to_ptr.vmem [resolvable:$true] %s581
          %s583 = sshll.u32 %s580, 4
          %s584 = int_to_ptr.hbm [resolvable:$true] %s583
          %589 = dma.vmem_to_hbm [thread:$0]  %s582, 256, %s584, %s569, 128, 128, 8
        $region48: #{tpu_custom_call.1} parent=27 // pred_fallthru
          _
      $region28: #{tpu_custom_call.1} parent=5 // pred_fallthru
        _
      %p590 = scmp.le.s32.totalorder 2, %s26
      // Predicated region
      $region49: #{tpu_custom_call.1} parent=5 // pred_check
        %p591 = pneg %p590
      $region50: #{tpu_custom_call.1} parent=5 // pred_check_branch
        %593 = sbr.rel (%p591) target = $region52
      $region51: #{tpu_custom_call.1} parent=5 // pred_region
        %s594 = ssub.s32 %s26, 2
        // Predicated region
        $region53: #{tpu_custom_call.1} parent=51 // pred_check
          %p595 = pneg %p107
        $region54: #{tpu_custom_call.1} parent=51 // pred_check_branch
          %597 = sbr.rel (%p595) target = $region56
        $region55: #{tpu_custom_call.1} parent=51 // pred_region
          %s598 = sand.u32 %s92, 1
          %s599 = scalar_lea.sflag [#allocation6], %s598
          %s600 = sand.u32 %s92, 1
          %s601 = smul.addr %s600, 16
          %s602 = scalar_lea.vmem [#allocation9], %s601
          %604 = dma.done %s599, 256
        $region56: #{tpu_custom_call.1} parent=51 // pred_fallthru
          _
      $region52: #{tpu_custom_call.1} parent=5 // pred_fallthru
        _
    $region6: #{tpu_custom_call.1} parent=1 // loop_footer
      %s30 = sadd.s32 1, %s26
    $region7: #{tpu_custom_call.1} parent=1 // loop_footer_branch
      %25 = sbr.rel target = $region3
    $region8: #{tpu_custom_call.1} parent=1 // loop_exit
      _
    %605 = vsyncpa [#allocation5], 1
    %s606 = scalar_lea.sflag [#allocation5], 1
    %607 = vsyncpa %s606, 1
    %608 = vsyncpa [#allocation8], 1
    %s609 = scalar_lea.sflag [#allocation8], 1
    %610 = vsyncpa %s609, 1
    %611 = vsyncpa [#allocation6], 1
    %s612 = scalar_lea.sflag [#allocation6], 1
    %613 = vsyncpa %s612, 1

</llo_original>
